<compile_context>
chip_gen: v6e
topology: v6e:2x2x1
jax: 0.10.0
libtpu: 0.0.40
codegen_flags: <defaults>
</compile_context>

<pallas_src>
import math

import jax
import jax.numpy as jnp
from jax.experimental import pallas as pl
from jax.experimental.pallas import tpu as pltpu

_LANE = 128
_SUBLANE = 8
_LOG_2PI = math.log(2.0 * math.pi)
_VMEM_LIMIT_BYTES = 32 * 1024 * 1024   # safe on v5e/v6e (128 MiB) and v7x (64 MiB)


def _round_up(x, m):
    return ((x + m - 1) // m) * m


def _choose_tile_b(batch):
    """Pick the batch tile.

    batch <= 128 : one tile (grid=(1,)) -- splitting is pure per-step overhead.
    batch  > 128 : >= 2 grid steps so dimension_semantics=("parallel",) can put
                   one tile on each of v7x's two TensorCores; tile rows are a
                   multiple of 128, capped at 2048 (all per-tile buffers remain
                   far under the VMEM limit on every generation).
    """
    b = max(int(batch), 1)
    if b <= 128:
        return _round_up(b, _SUBLANE)
    return min(2048, _round_up((b + 1) // 2, _LANE))


# ----------------------------------------------------------------------------
# Pallas kernels
# ----------------------------------------------------------------------------
def _actor_mean_kernel(obs_ref, w1_ref, b1_ref, w2_ref, b2_ref, w3_ref, b3_ref,
                       mean_ref):
    """Fused MLP forward: mean = relu(relu(obs@W1+b1)@W2+b2)@W3 + b3 (f32 accum)."""
    wdt = w1_ref.dtype
    x = obs_ref[...].astype(wdt)                        # cast in VMEM, no HBM pass
    h = jnp.dot(x, w1_ref[...], preferred_element_type=jnp.float32)
    h = jnp.maximum(h + b1_ref[...], 0.0)
    h = jnp.dot(h.astype(wdt), w2_ref[...], preferred_element_type=jnp.float32)
    h = jnp.maximum(h + b2_ref[...], 0.0)
    m = jnp.dot(h.astype(wdt), w3_ref[...], preferred_element_type=jnp.float32)
    mean_ref[...] = (m + b3_ref[...]).astype(mean_ref.dtype)


def _actor_mean_logp_kernel(obs_ref, act_ref, inv_std_ref, lp_const_ref,
                            w1_ref, b1_ref, w2_ref, b2_ref, w3_ref, b3_ref,
                            mean_ref, logp_ref):
    """Fused MLP + diagonal-Gaussian log_prob of `act` (one launch, no mean round-trip).

    logp is written as ONE value per row (block (TILE_B, 1)) -- no padded lanes.
    """
    wdt = w1_ref.dtype
    x = obs_ref[...].astype(wdt)
    h = jnp.dot(x, w1_ref[...], preferred_element_type=jnp.float32)
    h = jnp.maximum(h + b1_ref[...], 0.0)
    h = jnp.dot(h.astype(wdt), w2_ref[...], preferred_element_type=jnp.float32)
    h = jnp.maximum(h + b2_ref[...], 0.0)
    mean = jnp.dot(h.astype(wdt), w3_ref[...], preferred_element_type=jnp.float32)
    mean = mean + b3_ref[...]
    mean_ref[...] = mean.astype(mean_ref.dtype)

    z = (act_ref[...] - mean) * inv_std_ref[...]        # (TILE_B, act_dim), f32
    lp = -0.5 * (z * z) + lp_const_ref[...]
    logp_ref[...] = jnp.sum(lp, axis=-1, keepdims=True).astype(logp_ref.dtype)


# ----------------------------------------------------------------------------
# Jitted functional wrappers around pallas_call
# ----------------------------------------------------------------------------
def _build_actor_fns(obs_dim, act_dim, hidden_sizes, param_dtype):
    h1, h2 = hidden_sizes
    h1p = _round_up(h1, _LANE)
    h2p = _round_up(h2, _LANE)

    def _param_specs():
        # weights/biases: full-array blocks, constant index_map -> VMEM-resident
        return [
            pl.BlockSpec((obs_dim, h1p), lambda i: (0, 0)),
            pl.BlockSpec((1, h1p), lambda i: (0, 0)),
            pl.BlockSpec((h1p, h2p), lambda i: (0, 0)),
            pl.BlockSpec((1, h2p), lambda i: (0, 0)),
            pl.BlockSpec((h2p, act_dim), lambda i: (0, 0)),
            pl.BlockSpec((1, act_dim), lambda i: (0, 0)),
        ]

    wbytes = jnp.dtype(param_dtype).itemsize
    flops_per_row = 2 * (obs_dim * h1p + h1p * h2p + h2p * act_dim)
    param_bytes = ((obs_dim * h1p + h1p * h2p + h2p * act_dim) * wbytes
                   + (h1p + h2p + act_dim) * 4)
    cparams = pltpu.CompilerParams(dimension_semantics=("parallel",),
                                   vmem_limit_bytes=_VMEM_LIMIT_BYTES)

    def mean_fn(params, obs):
        b = obs.shape[0]
        tb = _choose_tile_b(b)
        nt = pl.cdiv(b, tb)
        obs = obs.astype(jnp.float32)
        return pl.pallas_call(
            _actor_mean_kernel,
            grid=(nt,),
            in_specs=[pl.BlockSpec((tb, obs_dim), lambda i: (i, 0))] + _param_specs(),
            out_specs=pl.BlockSpec((tb, act_dim), lambda i: (i, 0)),
            out_shape=jax.ShapeDtypeStruct((b, act_dim), jnp.float32),
            compiler_params=cparams,
            cost_estimate=pl.CostEstimate(
                flops=b * flops_per_row,
                transcendentals=0,
                bytes_accessed=b * obs_dim * 4 + param_bytes + b * act_dim * 4),
        )(obs, params["w1"], params["b1"], params["w2"], params["b2"],
          params["w3"], params["b3"])

    def mean_logp_fn(params, obs, act):
        b = obs.shape[0]
        tb = _choose_tile_b(b)
        nt = pl.cdiv(b, tb)
        obs = obs.astype(jnp.float32)
        act = act.astype(jnp.float32)

        # state-independent Gaussian terms precomputed OUTSIDE the kernel
        log_std = params["log_std"].astype(jnp.float32)          # (1, act_dim)
        inv_std = jnp.exp(-log_std)
        lp_const = -log_std - 0.5 * _LOG_2PI

        mean, logp = pl.pallas_call(
            _actor_mean_logp_kernel,
            grid=(nt,),
            in_specs=[pl.BlockSpec((tb, obs_dim), lambda i: (i, 0)),
                      pl.BlockSpec((tb, act_dim), lambda i: (i, 0)),
                      pl.BlockSpec((1, act_dim), lambda i: (0, 0)),
                      pl.BlockSpec((1, act_dim), lambda i: (0, 0))] + _param_specs(),
            out_specs=(pl.BlockSpec((tb, act_dim), lambda i: (i, 0)),
                       pl.BlockSpec((tb, 1), lambda i: (i, 0))),
            out_shape=(jax.ShapeDtypeStruct((b, act_dim), jnp.float32),
                       jax.ShapeDtypeStruct((b, 1), jnp.float32)),
            compiler_params=cparams,
            cost_estimate=pl.CostEstimate(
                flops=b * (flops_per_row + 6 * act_dim),
                transcendentals=0,
                bytes_accessed=(b * obs_dim * 4 + b * act_dim * 4 + param_bytes
                                + 2 * act_dim * 4 + b * act_dim * 4 + b * 4)),
        )(obs, act, inv_std, lp_const,
          params["w1"], params["b1"], params["w2"], params["b2"],
          params["w3"], params["b3"])
        return mean, logp[:, 0]

    return jax.jit(mean_fn), jax.jit(mean_logp_fn)


@jax.jit
def _gaussian_log_prob(mean, log_std, act):
    """Diagonal-Gaussian log_prob from a cached mean (no MLP recompute)."""
    z = (act.astype(jnp.float32) - mean) * jnp.exp(-log_std)
    return jnp.sum(-0.5 * z * z - log_std - 0.5 * _LOG_2PI, axis=-1)


# ----------------------------------------------------------------------------
# Actor wrapper (mirrors omnisafe Actor / GaussianActor semantics)
# ----------------------------------------------------------------------------
class GaussianActor:
    """JAX/Pallas port of omnisafe's Actor (Gaussian MLP policy), inference-only."""

    def __init__(self, obs_dim, act_dim, hidden_sizes, key,
                 param_dtype=jnp.bfloat16):
        assert len(hidden_sizes) == 2, "this kernel fuses exactly 2 hidden layers"
        self._obs_dim = obs_dim
        self._act_dim = act_dim
        self._hidden_sizes = list(hidden_sizes)
        self._param_dtype = param_dtype
        self._after_inference = False
        self._current_mean = None

        h1, h2 = hidden_sizes
        h1p = _round_up(h1, _LANE)
        h2p = _round_up(h2, _LANE)

        def _kaiming_pad(k, fan_in, fan_out, rows, cols):
            bound = math.sqrt(6.0 / fan_in)
            w = jax.random.uniform(k, (fan_in, fan_out), jnp.float32, -bound, bound)
            wp = jnp.zeros((rows, cols), jnp.float32).at[:fan_in, :fan_out].set(w)
            return wp.astype(param_dtype)

        k1, k2, k3, k_rng = jax.random.split(key, 4)
        # NOTE: only the hidden dims are padded (to 128).  The padded columns of
        # w1/b1, w2/b2 and the padded rows of w2/w3 are zero, so padded hidden
        # lanes contribute nothing.  Training would need to keep them zeroed.
        self.params = {
            "w1": _kaiming_pad(k1, obs_dim, h1, obs_dim, h1p),
            "b1": jnp.zeros((1, h1p), jnp.float32),
            "w2": _kaiming_pad(k2, h1, h2, h1p, h2p),
            "b2": jnp.zeros((1, h2p), jnp.float32),
            "w3": _kaiming_pad(k3, h2, act_dim, h2p, act_dim),
            "b3": jnp.zeros((1, act_dim), jnp.float32),
            # state-independent log_std parameter (omnisafe default -0.5)
            "log_std": jnp.full((1, act_dim), -0.5, jnp.float32),
        }
        self._rng = k_rng
        self._mean_fn, self._mean_logp_fn = _build_actor_fns(
            obs_dim, act_dim, hidden_sizes, param_dtype)

    @property
    def log_std(self):
        return self.params["log_std"]

    def _distribution(self, obs):
        mean = self._mean_fn(self.params, obs)
        std = jnp.exp(self.params["log_std"])          # (1, act_dim), broadcasts
        return mean, std

    def forward(self, obs):
        mean, std = self._distribution(obs)
        self._current_mean = mean
        self._after_inference = True
        return mean, std

    def predict(self, obs, deterministic=False, key=None):
        mean, std = self.forward(obs)
        if deterministic:
            return mean
        if key is None:
            self._rng, key = jax.random.split(self._rng)   # fresh noise per call
        noise = jax.random.normal(key, mean.shape, mean.dtype)
        return mean + std * noise                          # rsample

    def log_prob(self, act):
        """log_prob of `act` under the distribution from the last forward/predict.

        Reuses the cached mean -- no second MLP launch, no obs re-read.
        """
        assert self._after_inference, "log_prob requires forward/predict first"
        logp = _gaussian_log_prob(self._current_mean, self.params["log_std"], act)
        self._after_inference = False
        return logp

    def forward_and_log_prob(self, obs, act):
        """Single fused pallas_call emitting both the action mean and log_prob(act)."""
        mean, logp = self._mean_logp_fn(self.params, obs, act)
        self._current_mean = mean
        self._after_inference = True
        return mean, jnp.exp(self.params["log_std"]), logp


# ----------------------------------------------------------------------------
if __name__ == "__main__":
    key = jax.random.PRNGKey(0)
    k_param, k_obs, k_act, k_obs2, k_act2, k_smpl = jax.random.split(key, 6)

    batch, obs_dim, act_dim = 8, 32, 4
    hidden_sizes = [32, 32]

    actor = GaussianActor(obs_dim, act_dim, hidden_sizes, k_param)
    p = actor.params
    dt = actor._param_dtype
    log_std = p["log_std"]

    def ref_mean(o):
        x = o.astype(dt)
        h = jnp.maximum(jnp.dot(x, p["w1"], preferred_element_type=jnp.float32)
                        + p["b1"], 0.0)
        h = jnp.maximum(jnp.dot(h.astype(dt), p["w2"],
                                preferred_element_type=jnp.float32) + p["b2"], 0.0)
        return jnp.dot(h.astype(dt), p["w3"],
                       preferred_element_type=jnp.float32) + p["b3"]

    def ref_logp(m, a):
        z = (a - m) * jnp.exp(-log_std)
        return jnp.sum(-0.5 * z * z - log_std - 0.5 * _LOG_2PI, axis=-1)

    # ---- small batch (single grid step) --------------------------------------
    obs = jax.random.normal(k_obs, (batch, obs_dim), jnp.float32)

    mean, std = actor.forward(obs)
    mean = jax.block_until_ready(mean)

    act_det = jax.block_until_ready(actor.predict(obs, deterministic=True))
    act = jax.block_until_ready(actor.predict(obs, deterministic=False, key=k_smpl))
    act2 = jax.block_until_ready(actor.predict(obs, deterministic=False))   # internal rng

    # forward -> log_prob uses the cached mean (no MLP recompute)
    _ = actor.forward(obs)
    lp = jax.block_until_ready(actor.log_prob(act))

    # single-launch fused path (mean + log_prob from one pallas_call)
    mean_f, std_f, lp_f = actor.forward_and_log_prob(obs, act)
    mean_f, lp_f = jax.block_until_ready((mean_f, lp_f))

    m_ref = ref_mean(obs)
    lp_ref = ref_logp(m_ref, act)

    assert mean.shape == (batch, act_dim)
    assert act_det.shape == (batch, act_dim)
    assert lp.shape == (batch,) and lp_f.shape == (batch,)
    assert jnp.allclose(mean, m_ref, atol=1e-3, rtol=1e-3)
    assert jnp.allclose(act_det, m_ref, atol=1e-3, rtol=1e-3)
    assert jnp.allclose(mean_f, m_ref, atol=1e-3, rtol=1e-3)
    assert jnp.allclose(lp, lp_ref, atol=1e-3, rtol=1e-3)
    assert jnp.allclose(lp_f, lp_ref, atol=1e-3, rtol=1e-3)
    assert not bool(jnp.allclose(act, act2)), "stochastic samples should differ"

    # ---- larger, non-aligned batch (2 grid steps + partial trailing block) ----
    batch2 = 300
    obs2 = jax.random.normal(k_obs2, (batch2, obs_dim), jnp.float32)
    act2b = jax.random.normal(k_act2, (batch2, act_dim), jnp.float32)

    mean2, _ = actor.forward(obs2)
    mean2f, _, lp2f = actor.forward_and_log_prob(obs2, act2b)
    mean2, mean2f, lp2f = jax.block_until_ready((mean2, mean2f, lp2f))

    m2_ref = ref_mean(obs2)
    lp2_ref = ref_logp(m2_ref, act2b)

    assert mean2.shape == (batch2, act_dim) and lp2f.shape == (batch2,)
    assert jnp.allclose(mean2, m2_ref, atol=1e-3, rtol=1e-3)
    assert jnp.allclose(mean2f, m2_ref, atol=1e-3, rtol=1e-3)
    assert jnp.allclose(lp2f, lp2_ref, atol=1e-3, rtol=1e-3)

    print("KERNEL_OK")
</pallas_src>

<mosaic_0001>
module attributes {stable_mosaic.version = 11 : i64} {
  func.func @_actor_mean_kernel(%arg0: i32, %arg1: memref<8x32xf32, #tpu.memory_space<vmem>>, %arg2: memref<32x128xbf16, #tpu.memory_space<vmem>>, %arg3: memref<1x128xf32, #tpu.memory_space<vmem>>, %arg4: memref<128x128xbf16, #tpu.memory_space<vmem>>, %arg5: memref<1x128xf32, #tpu.memory_space<vmem>>, %arg6: memref<128x4xbf16, #tpu.memory_space<vmem>>, %arg7: memref<1x4xf32, #tpu.memory_space<vmem>>, %arg8: memref<8x4xf32, #tpu.memory_space<vmem>>) attributes {dimension_semantics = [#tpu.dimension_semantics<parallel>], iteration_bounds = array<i64: 1>, scalar_prefetch = 0 : i64, scratch_operands = 0 : i64, tpu.core_type = #tpu.core_type<tc>, window_params = [{transform_indices = @transform_0, window_bounds = array<i64: 8, 32>}, {pipeline_mode = #tpu.pipeline_mode<synchronous>, transform_indices = @transform_1, window_bounds = array<i64: 32, 128>}, {pipeline_mode = #tpu.pipeline_mode<synchronous>, transform_indices = @transform_2, window_bounds = array<i64: 1, 128>}, {pipeline_mode = #tpu.pipeline_mode<synchronous>, transform_indices = @transform_3, window_bounds = array<i64: 128, 128>}, {pipeline_mode = #tpu.pipeline_mode<synchronous>, transform_indices = @transform_4, window_bounds = array<i64: 1, 128>}, {pipeline_mode = #tpu.pipeline_mode<synchronous>, transform_indices = @transform_5, window_bounds = array<i64: 128, 4>}, {pipeline_mode = #tpu.pipeline_mode<synchronous>, transform_indices = @transform_6, window_bounds = array<i64: 1, 4>}, {transform_indices = @transform_7, window_bounds = array<i64: 8, 4>}]} {
    %c0 = arith.constant 0 : index
    %c0_0 = arith.constant 0 : index
    %0 = vector.load %arg1[%c0, %c0_0] : memref<8x32xf32, #tpu.memory_space<vmem>>, vector<8x32xf32>
    %1 = arith.truncf %0 : vector<8x32xf32> to vector<8x32xbf16>
    %c0_1 = arith.constant 0 : index
    %c0_2 = arith.constant 0 : index
    %2 = vector.load %arg2[%c0_1, %c0_2] : memref<32x128xbf16, #tpu.memory_space<vmem>>, vector<32x128xbf16>
    %cst = arith.constant dense<0.000000e+00> : vector<8x128xf32>
    %3 = tpu.matmul %1, %2, %cst {dimension_numbers = #tpu.dot_dimension_numbers<[1], [0], [0], [1], [0, 0, 1, 1], [], []>} : vector<8x32xbf16>, vector<32x128xbf16>, vector<8x128xf32> -> vector<8x128xf32>
    %c0_3 = arith.constant 0 : index
    %c0_4 = arith.constant 0 : index
    %4 = vector.load %arg3[%c0_3, %c0_4] : memref<1x128xf32, #tpu.memory_space<vmem>>, vector<1x128xf32>
    %5 = vector.broadcast %4 : vector<1x128xf32> to vector<8x128xf32>
    %6 = arith.addf %3, %5 : vector<8x128xf32>
    %cst_5 = arith.constant 0.000000e+00 : f32
    %7 = vector.broadcast %cst_5 : f32 to vector<8x128xf32>
    %8 = arith.maximumf %6, %7 : vector<8x128xf32>
    %9 = arith.truncf %8 : vector<8x128xf32> to vector<8x128xbf16>
    %c0_6 = arith.constant 0 : index
    %c0_7 = arith.constant 0 : index
    %10 = vector.load %arg4[%c0_6, %c0_7] : memref<128x128xbf16, #tpu.memory_space<vmem>>, vector<128x128xbf16>
    %cst_8 = arith.constant dense<0.000000e+00> : vector<8x128xf32>
    %11 = tpu.matmul %9, %10, %cst_8 {dimension_numbers = #tpu.dot_dimension_numbers<[1], [0], [0], [1], [0, 0, 1, 1], [], []>} : vector<8x128xbf16>, vector<128x128xbf16>, vector<8x128xf32> -> vector<8x128xf32>
    %c0_9 = arith.constant 0 : index
    %c0_10 = arith.constant 0 : index
    %12 = vector.load %arg5[%c0_9, %c0_10] : memref<1x128xf32, #tpu.memory_space<vmem>>, vector<1x128xf32>
    %13 = vector.broadcast %12 : vector<1x128xf32> to vector<8x128xf32>
    %14 = arith.addf %11, %13 : vector<8x128xf32>
    %cst_11 = arith.constant 0.000000e+00 : f32
    %15 = vector.broadcast %cst_11 : f32 to vector<8x128xf32>
    %16 = arith.maximumf %14, %15 : vector<8x128xf32>
    %17 = arith.truncf %16 : vector<8x128xf32> to vector<8x128xbf16>
    %c0_12 = arith.constant 0 : index
    %c0_13 = arith.constant 0 : index
    %18 = vector.load %arg6[%c0_12, %c0_13] : memref<128x4xbf16, #tpu.memory_space<vmem>>, vector<128x4xbf16>
    %cst_14 = arith.constant dense<0.000000e+00> : vector<8x4xf32>
    %19 = tpu.matmul %17, %18, %cst_14 {dimension_numbers = #tpu.dot_dimension_numbers<[1], [0], [0], [1], [0, 0, 1, 1], [], []>} : vector<8x128xbf16>, vector<128x4xbf16>, vector<8x4xf32> -> vector<8x4xf32>
    %c0_15 = arith.constant 0 : index
    %c0_16 = arith.constant 0 : index
    %20 = vector.load %arg7[%c0_15, %c0_16] : memref<1x4xf32, #tpu.memory_space<vmem>>, vector<1x4xf32>
    %21 = vector.broadcast %20 : vector<1x4xf32> to vector<8x4xf32>
    %22 = arith.addf %19, %21 : vector<8x4xf32>
    %c0_17 = arith.constant 0 : index
    %c0_18 = arith.constant 0 : index
    %23 = vector.load %arg8[%c0_17, %c0_18] : memref<8x4xf32, #tpu.memory_space<vmem>>, vector<8x4xf32>
    tpu.vector_store %arg8[%c0_17, %c0_18], %22 {strides = array<i32>} : memref<8x4xf32, #tpu.memory_space<vmem>>, vector<8x4xf32>,
    return
  }
  func.func @transform_0(%arg0: i32) -> (i32, i32) {
    %c0_i32 = arith.constant 0 : i32
    %c0_i32_0 = arith.constant 0 : i32
    return %arg0, %c0_i32 : i32, i32
  }
  func.func @transform_1(%arg0: i32) -> (i32, i32) {
    %c0_i32 = arith.constant 0 : i32
    %c0_i32_0 = arith.constant 0 : i32
    %c0_i32_1 = arith.constant 0 : i32
    return %c0_i32, %c0_i32_0 : i32, i32
  }
  func.func @transform_2(%arg0: i32) -> (i32, i32) {
    %c0_i32 = arith.constant 0 : i32
    %c0_i32_0 = arith.constant 0 : i32
    %c0_i32_1 = arith.constant 0 : i32
    return %c0_i32, %c0_i32_0 : i32, i32
  }
  func.func @transform_3(%arg0: i32) -> (i32, i32) {
    %c0_i32 = arith.constant 0 : i32
    %c0_i32_0 = arith.constant 0 : i32
    %c0_i32_1 = arith.constant 0 : i32
    return %c0_i32, %c0_i32_0 : i32, i32
  }
  func.func @transform_4(%arg0: i32) -> (i32, i32) {
    %c0_i32 = arith.constant 0 : i32
    %c0_i32_0 = arith.constant 0 : i32
    %c0_i32_1 = arith.constant 0 : i32
    return %c0_i32, %c0_i32_0 : i32, i32
  }
  func.func @transform_5(%arg0: i32) -> (i32, i32) {
    %c0_i32 = arith.constant 0 : i32
    %c0_i32_0 = arith.constant 0 : i32
    %c0_i32_1 = arith.constant 0 : i32
    return %c0_i32, %c0_i32_0 : i32, i32
  }
  func.func @transform_6(%arg0: i32) -> (i32, i32) {
    %c0_i32 = arith.constant 0 : i32
    %c0_i32_0 = arith.constant 0 : i32
    %c0_i32_1 = arith.constant 0 : i32
    return %c0_i32, %c0_i32_0 : i32, i32
  }
  func.func @transform_7(%arg0: i32) -> (i32, i32) {
    %c0_i32 = arith.constant 0 : i32
    %c0_i32_0 = arith.constant 0 : i32
    return %arg0, %c0_i32 : i32, i32
  }
}

</mosaic_0001>

<llo_original>
// kernel: mean_fn.1
$region0: #{mean_fn.1}
  #allocation0 [shape = 'u32[]', space=smem, size = 0x4, offset = 0x4, fixed_abs, tag = 'smem constant byte address 0x4 - core index']
  #allocation1 [shape = 'u32[144,128]{1,0:T(1,128)}', space=vmem, size = 0x12000, scoped, tag = 'internal scratch']
  %s0 = inlined_call_operand.vmem [shape: f32[8,32], index: 0, kind: input, shape index: {}]
  %s1 = inlined_call_operand.hbm [shape: bf16[32,128], index: 1, kind: input, shape index: {}]
  %s2 = inlined_call_operand.vmem [shape: f32[1,128], index: 2, kind: input, shape index: {}]
  %s3 = inlined_call_operand.vmem [shape: bf16[128,128], index: 3, kind: input, shape index: {}]
  %s4 = inlined_call_operand.hbm [shape: f32[1,128], index: 4, kind: input, shape index: {}]
  %s5 = inlined_call_operand.vmem [shape: bf16[128,4], index: 5, kind: input, shape index: {}]
  %s6 = inlined_call_operand.hbm [shape: f32[1,4], index: 6, kind: input, shape index: {}]
  %s7 = inlined_call_operand.vmem [shape: f32[8,4], index: 7, kind: output, shape index: {}]
  %s8 = sld [smem:[#allocation0]]
  $region50: #{mean_fn.1} parent=0
    _
  %s10 = ssub.s32 1, %s8
  %s11 = scalar_select 0, %s10, %s8
  $region1: #{mean_fn.1} parent=0
    #allocation2 [shape = 'u8[8192]{0}', space=vmem, size = 0x2000, scoped, tag = 'input window, operand 1, single buffered']
    #allocation3 [shape = 's32[1]{0}', space=sflag, size = 0x4, scoped, tag = 'scoped memory for mean_fn.1']
    #allocation4 [shape = 'u8[512]{0}', space=vmem, size = 0x400, scoped, tag = 'input window, operand 4, single buffered']
    #allocation5 [shape = 's32[1]{0}', space=sflag, size = 0x4, scoped, tag = 'scoped memory for mean_fn.1']
    #allocation6 [shape = 'u8[512]{0}', space=vmem, size = 0x400, scoped, tag = 'input window, operand 6, single buffered']
    %12 = vsyncpa [#allocation3], 0
    %13 = vsyncpa [#allocation5], 0
    // Predicated region
    $region2: #{mean_fn.1} parent=1 // pred_check
      _
    $region3: #{mean_fn.1} parent=1 // pred_check_branch
      %15 = sbr.rel (0) target = $region5
    $region4: #{mean_fn.1} parent=1 // pred_region
      _
    $region5: #{mean_fn.1} parent=1 // pred_fallthru
      _
    // Predicated region
    $region6: #{mean_fn.1} parent=1 // pred_check
      _
    $region7: #{mean_fn.1} parent=1 // pred_check_branch
      %17 = sbr.rel (0) target = $region9
    $region8: #{mean_fn.1} parent=1 // pred_region
      %s19 = ssub.s32 256, 256
      %20 = vsyncadd [#allocation3], %s19
      %s21 = sshll.u32 [#allocation2], 4
      %s22 = int_to_ptr.vmem [resolvable:$true] %s21
      %27 = dma.hbm_to_vmem [thread:$0]  %s1, 256, %s22, [#allocation3], 64, 64, 4
    $region9: #{mean_fn.1} parent=1 // pred_fallthru
      _
    // Predicated region
    $region10: #{mean_fn.1} parent=1 // pred_check
      _
    $region11: #{mean_fn.1} parent=1 // pred_check_branch
      %29 = sbr.rel (0) target = $region13
    $region12: #{mean_fn.1} parent=1 // pred_region
      _
    $region13: #{mean_fn.1} parent=1 // pred_fallthru
      _
    // Predicated region
    $region14: #{mean_fn.1} parent=1 // pred_check
      _
    $region15: #{mean_fn.1} parent=1 // pred_check_branch
      %31 = sbr.rel (0) target = $region17
    $region16: #{mean_fn.1} parent=1 // pred_region
      _
    $region17: #{mean_fn.1} parent=1 // pred_fallthru
      _
    // Predicated region
    $region18: #{mean_fn.1} parent=1 // pred_check
      _
    $region19: #{mean_fn.1} parent=1 // pred_check_branch
      %33 = sbr.rel (0) target = $region21
    $region20: #{mean_fn.1} parent=1 // pred_region
      %s35 = ssub.s32 16, 16
      %36 = vsyncadd [#allocation5], %s35
      %s38 = sshll.u32 [#allocation4], 4
      %s39 = int_to_ptr.vmem [resolvable:$true] %s38
      %41 = dma.hbm_to_vmem [thread:$0]  %s4, 16, %s39, [#allocation5]
    $region21: #{mean_fn.1} parent=1 // pred_fallthru
      _
    // Predicated region
    $region22: #{mean_fn.1} parent=1 // pred_check
      _
    $region23: #{mean_fn.1} parent=1 // pred_check_branch
      %43 = sbr.rel (0) target = $region25
    $region24: #{mean_fn.1} parent=1 // pred_region
      _
    $region25: #{mean_fn.1} parent=1 // pred_fallthru
      _
    // Predicated region
    $region26: #{mean_fn.1} parent=1 // pred_check
      _
    $region27: #{mean_fn.1} parent=1 // pred_check_branch
      %45 = sbr.rel (0) target = $region29
    $region28: #{mean_fn.1} parent=1 // pred_region
      %s47 = ssub.s32 16, 16
      %48 = vsyncadd [#allocation5], %s47
      %s50 = sshll.u32 [#allocation6], 4
      %s51 = int_to_ptr.vmem [resolvable:$true] %s50
      %53 = dma.hbm_to_vmem [thread:$0]  %s6, 16, %s51, [#allocation5]
    $region29: #{mean_fn.1} parent=1 // pred_fallthru
      _
    // Predicated region
    $region30: #{mean_fn.1} parent=1 // pred_check
      _
    $region31: #{mean_fn.1} parent=1 // pred_check_branch
      %55 = sbr.rel (0) target = $region33
    $region32: #{mean_fn.1} parent=1 // pred_region
      %56 = dma.done [#allocation3], 256
    $region33: #{mean_fn.1} parent=1 // pred_fallthru
      _
    // Predicated region
    $region34: #{mean_fn.1} parent=1 // pred_check
      _
    $region35: #{mean_fn.1} parent=1 // pred_check_branch
      %58 = sbr.rel (0) target = $region37
    $region36: #{mean_fn.1} parent=1 // pred_region
      %59 = dma.done [#allocation5], 16
    $region37: #{mean_fn.1} parent=1 // pred_fallthru
      _
    // Predicated region
    $region38: #{mean_fn.1} parent=1 // pred_check
      _
    $region39: #{mean_fn.1} parent=1 // pred_check_branch
      %61 = sbr.rel (0) target = $region41
    $region40: #{mean_fn.1} parent=1 // pred_region
      %62 = dma.done [#allocation5], 16
    $region41: #{mean_fn.1} parent=1 // pred_fallthru
      _
    %v64 = vld [vmem:[%s0] sm:$0xff]
    %v65 = vpack.c.bf16 %v64, %v64
    %v66 = vld [vmem:[#allocation2] sm:$0xf]
    %v67 = vld [vmem:[#allocation2 + $0x4] sm:$0xf]
    %v68 = vld [vmem:[#allocation2 + $0x8] sm:$0xf]
    %v69 = vld [vmem:[#allocation2 + $0xc] sm:$0xf]
    %v70 = vld [vmem:[%s2] sm:$0x1]
    %v72 = vlaneseq
    %v73 = vshrl.u32 %v72, 7
    %v74 = vsub.s32 0, %v73
    %v75 = vrot.slane %v70, %v74
    %v81 = vunpack.c.l.b16 %v66
    %v82 = vunpack.c.l.b16 %v67
    %v83 = vunpack.c.l.b16 %v68
    %v84 = vunpack.c.l.b16 %v69
    %v85 = vpack.c.b16 %v82, %v81
    %v86 = vpack.c.b16 %v84, %v83
    %vm89 = vcmask 261120
    %v91 = vsel %vm89, %v65, 0
    %93 = vmatprep.subr.bf16.mxu0 0
    %94 = vmatpush1.bf16.msra.mxu0 0
    %95 = vmatprep.subr.bf16.mxu0 0
    %96 = vmatpush1.bf16.msra.mxu0 0
    %97 = vmatprep.subr.bf16.mxu0 0
    %98 = vmatpush1.bf16.msra.mxu0 0
    %99 = vmatprep.subr.bf16.mxu0 0
    %100 = vmatpush1.bf16.msra.mxu0 0
    %101 = vmatprep.subr.bf16.mxu0 0
    %102 = vmatpush1.bf16.msra.mxu0 0
    %103 = vmatprep.subr.bf16.mxu0 0
    %104 = vmatpush1.bf16.msra.mxu0 0
    %105 = vmatprep.subr.bf16.mxu0 0
    %106 = vmatpush1.bf16.msra.mxu0 %v86
    %107 = vmatprep.subr.bf16.mxu0 0
    %108 = vmatpush1.bf16.msra.mxu0 %v85
    %109 = vmatprep.subr.bf16.mxu0 0
    %110 = vmatpush2.bf16.msra.mxu0 0
    %111 = vmatprep.subr.bf16.mxu0 0
    %112 = vmatpush2.bf16.msra.mxu0 0
    %113 = vmatprep.subr.bf16.mxu0 0
    %114 = vmatpush2.bf16.msra.mxu0 0
    %115 = vmatprep.subr.bf16.mxu0 0
    %116 = vmatpush2.bf16.msra.mxu0 0
    %117 = vmatprep.subr.bf16.mxu0 0
    %118 = vmatpush2.bf16.msra.mxu0 0
    %119 = vmatprep.subr.bf16.mxu0 0
    %120 = vmatpush2.bf16.msra.mxu0 0
    %121 = vmatprep.subr.bf16.mxu0 0
    %122 = vmatpush2.bf16.msra.mxu0 0
    %123 = vmatprep.subr.bf16.mxu0 0
    %124 = vmatpush2.bf16.msra.mxu0 0
    %125 = vmatprep.mubr.bf16.mxu0 0
    %126 = vmatmul.mubr.bf16.gmra.mxu0 %v91
    %v127 = vpop.f32.mrf.mxu0
    %v128 = vadd.f32 %v75, %v127
    %v129 = vpop.f32.mrf.mxu0
    %v130 = vpop.f32.mrf.mxu0
    %v131 = vpop.f32.mrf.mxu0
    %132 = vdwg.mxu0
    %v133 = vmax.f32 %v128, 0.0
    %v134 = vpack.c.bf16 %v133, %v133
    %v135 = vld [vmem:[%s3] sm:$0xf]
    %v136 = vld [vmem:[%s3 + $0x4] sm:$0xf]
    %v137 = vld [vmem:[%s3 + $0x8] sm:$0xf]
    %v138 = vld [vmem:[%s3 + $0xc] sm:$0xf]
    %v139 = vld [vmem:[%s3 + $0x10] sm:$0xf]
    %v140 = vld [vmem:[%s3 + $0x14] sm:$0xf]
    %v141 = vld [vmem:[%s3 + $0x18] sm:$0xf]
    %v142 = vld [vmem:[%s3 + $0x1c] sm:$0xf]
    %v143 = vld [vmem:[%s3 + $0x20] sm:$0xf]
    %v144 = vld [vmem:[%s3 + $0x24] sm:$0xf]
    %v145 = vld [vmem:[%s3 + $0x28] sm:$0xf]
    %v146 = vld [vmem:[%s3 + $0x2c] sm:$0xf]
    %v147 = vld [vmem:[%s3 + $0x30] sm:$0xf]
    %v148 = vld [vmem:[%s3 + $0x34] sm:$0xf]
    %v149 = vld [vmem:[%s3 + $0x38] sm:$0xf]
    %v150 = vld [vmem:[%s3 + $0x3c] sm:$0xf]
    %v151 = vld [vmem:[#allocation4] sm:$0x1]
    %v153 = vlaneseq
    %v154 = vshrl.u32 %v153, 7
    %v155 = vsub.s32 0, %v154
    %v156 = vrot.slane %v151, %v155
    %v174 = vunpack.c.l.b16 %v135
    %v175 = vunpack.c.l.b16 %v136
    %v176 = vunpack.c.l.b16 %v137
    %v177 = vunpack.c.l.b16 %v138
    %v178 = vunpack.c.l.b16 %v139
    %v179 = vunpack.c.l.b16 %v140
    %v180 = vunpack.c.l.b16 %v141
    %v181 = vunpack.c.l.b16 %v142
    %v182 = vunpack.c.l.b16 %v143
    %v183 = vunpack.c.l.b16 %v144
    %v184 = vunpack.c.l.b16 %v145
    %v185 = vunpack.c.l.b16 %v146
    %v186 = vunpack.c.l.b16 %v147
    %v187 = vunpack.c.l.b16 %v148
    %v188 = vunpack.c.l.b16 %v149
    %v189 = vunpack.c.l.b16 %v150
    %v190 = vpack.c.b16 %v175, %v174
    %v191 = vpack.c.b16 %v177, %v176
    %v192 = vpack.c.b16 %v179, %v178
    %v193 = vpack.c.b16 %v181, %v180
    %v194 = vpack.c.b16 %v183, %v182
    %v195 = vpack.c.b16 %v185, %v184
    %v196 = vpack.c.b16 %v187, %v186
    %v197 = vpack.c.b16 %v189, %v188
    %206 = vmatprep.subr.bf16.mxu0 0
    %207 = vmatpush1.bf16.msra.mxu0 %v197
    %208 = vmatprep.subr.bf16.mxu0 0
    %209 = vmatpush1.bf16.msra.mxu0 %v196
    %210 = vmatprep.subr.bf16.mxu0 0
    %211 = vmatpush1.bf16.msra.mxu0 %v195
    %212 = vmatprep.subr.bf16.mxu0 0
    %213 = vmatpush1.bf16.msra.mxu0 %v194
    %214 = vmatprep.subr.bf16.mxu0 0
    %215 = vmatpush1.bf16.msra.mxu0 %v193
    %216 = vmatprep.subr.bf16.mxu0 0
    %217 = vmatpush1.bf16.msra.mxu0 %v192
    %218 = vmatprep.subr.bf16.mxu0 0
    %219 = vmatpush1.bf16.msra.mxu0 %v191
    %220 = vmatprep.subr.bf16.mxu0 0
    %221 = vmatpush1.bf16.msra.mxu0 %v190
    %222 = vmatprep.subr.bf16.mxu0 0
    %223 = vmatpush2.bf16.msra.mxu0 0
    %224 = vmatprep.subr.bf16.mxu0 0
    %225 = vmatpush2.bf16.msra.mxu0 0
    %226 = vmatprep.subr.bf16.mxu0 0
    %227 = vmatpush2.bf16.msra.mxu0 0
    %228 = vmatprep.subr.bf16.mxu0 0
    %229 = vmatpush2.bf16.msra.mxu0 0
    %230 = vmatprep.subr.bf16.mxu0 0
    %231 = vmatpush2.bf16.msra.mxu0 0
    %232 = vmatprep.subr.bf16.mxu0 0
    %233 = vmatpush2.bf16.msra.mxu0 0
    %234 = vmatprep.subr.bf16.mxu0 0
    %235 = vmatpush2.bf16.msra.mxu0 0
    %236 = vmatprep.subr.bf16.mxu0 0
    %237 = vmatpush2.bf16.msra.mxu0 0
    %238 = vmatprep.mubr.bf16.mxu0 0
    %239 = vmatmul.mubr.bf16.gmra.mxu0 %v134
    %v240 = vpop.f32.mrf.mxu0
    %v241 = vadd.f32 %v156, %v240
    %v242 = vpop.f32.mrf.mxu0
    %v243 = vpop.f32.mrf.mxu0
    %v244 = vpop.f32.mrf.mxu0
    %245 = vdwg.mxu0
    %v246 = vmax.f32 %v241, 0.0
    %v247 = vpack.c.bf16 %v246, %v246
    %v248 = vld [vmem:[%s5] sm:$0xf]
    %v249 = vld [vmem:[%s5 + $0x4] sm:$0xf]
    %v250 = vld [vmem:[%s5 + $0x8] sm:$0xf]
    %v251 = vld [vmem:[%s5 + $0xc] sm:$0xf]
    %v252 = vld [vmem:[%s5 + $0x10] sm:$0xf]
    %v253 = vld [vmem:[%s5 + $0x14] sm:$0xf]
    %v254 = vld [vmem:[%s5 + $0x18] sm:$0xf]
    %v255 = vld [vmem:[%s5 + $0x1c] sm:$0xf]
    %v256 = vld [vmem:[%s5 + $0x20] sm:$0xf]
    %v257 = vld [vmem:[%s5 + $0x24] sm:$0xf]
    %v258 = vld [vmem:[%s5 + $0x28] sm:$0xf]
    %v259 = vld [vmem:[%s5 + $0x2c] sm:$0xf]
    %v260 = vld [vmem:[%s5 + $0x30] sm:$0xf]
    %v261 = vld [vmem:[%s5 + $0x34] sm:$0xf]
    %v262 = vld [vmem:[%s5 + $0x38] sm:$0xf]
    %v263 = vld [vmem:[%s5 + $0x3c] sm:$0xf]
    %v264 = vld [vmem:[#allocation6] sm:$0x1]
    %v266 = vlaneseq
    %v267 = vshrl.u32 %v266, 7
    %v268 = vsub.s32 0, %v267
    %v269 = vrot.slane %v264, %v268
    %v287 = vunpack.c.l.b16 %v248
    %v288 = vunpack.c.l.b16 %v249
    %v289 = vunpack.c.l.b16 %v250
    %v290 = vunpack.c.l.b16 %v251
    %v291 = vunpack.c.l.b16 %v252
    %v292 = vunpack.c.l.b16 %v253
    %v293 = vunpack.c.l.b16 %v254
    %v294 = vunpack.c.l.b16 %v255
    %v295 = vunpack.c.l.b16 %v256
    %v296 = vunpack.c.l.b16 %v257
    %v297 = vunpack.c.l.b16 %v258
    %v298 = vunpack.c.l.b16 %v259
    %v299 = vunpack.c.l.b16 %v260
    %v300 = vunpack.c.l.b16 %v261
    %v301 = vunpack.c.l.b16 %v262
    %v302 = vunpack.c.l.b16 %v263
    %v303 = vpack.c.b16 %v288, %v287
    %v304 = vpack.c.b16 %v290, %v289
    %v305 = vpack.c.b16 %v292, %v291
    %v306 = vpack.c.b16 %v294, %v293
    %v307 = vpack.c.b16 %v296, %v295
    %v308 = vpack.c.b16 %v298, %v297
    %v309 = vpack.c.b16 %v300, %v299
    %v310 = vpack.c.b16 %v302, %v301
    %319 = vmatprep.subr.bf16.mxu0 0
    %320 = vmatpush1.bf16.msra.mxu0 %v310
    %321 = vmatprep.subr.bf16.mxu0 0
    %322 = vmatpush1.bf16.msra.mxu0 %v309
    %323 = vmatprep.subr.bf16.mxu0 0
    %324 = vmatpush1.bf16.msra.mxu0 %v308
    %325 = vmatprep.subr.bf16.mxu0 0
    %326 = vmatpush1.bf16.msra.mxu0 %v307
    %327 = vmatprep.subr.bf16.mxu0 0
    %328 = vmatpush1.bf16.msra.mxu0 %v306
    %329 = vmatprep.subr.bf16.mxu0 0
    %330 = vmatpush1.bf16.msra.mxu0 %v305
    %331 = vmatprep.subr.bf16.mxu0 0
    %332 = vmatpush1.bf16.msra.mxu0 %v304
    %333 = vmatprep.subr.bf16.mxu0 0
    %334 = vmatpush1.bf16.msra.mxu0 %v303
    %335 = vmatprep.subr.bf16.mxu0 0
    %336 = vmatpush2.bf16.msra.mxu0 0
    %337 = vmatprep.subr.bf16.mxu0 0
    %338 = vmatpush2.bf16.msra.mxu0 0
    %339 = vmatprep.subr.bf16.mxu0 0
    %340 = vmatpush2.bf16.msra.mxu0 0
    %341 = vmatprep.subr.bf16.mxu0 0
    %342 = vmatpush2.bf16.msra.mxu0 0
    %343 = vmatprep.subr.bf16.mxu0 0
    %344 = vmatpush2.bf16.msra.mxu0 0
    %345 = vmatprep.subr.bf16.mxu0 0
    %346 = vmatpush2.bf16.msra.mxu0 0
    %347 = vmatprep.subr.bf16.mxu0 0
    %348 = vmatpush2.bf16.msra.mxu0 0
    %349 = vmatprep.subr.bf16.mxu0 0
    %350 = vmatpush2.bf16.msra.mxu0 0
    %351 = vmatprep.mubr.bf16.mxu0 0
    %352 = vmatmul.mubr.bf16.gmra.mxu0 %v247
    %v353 = vpop.f32.mrf.mxu0
    %v354 = vadd.f32 %v269, %v353
    %v355 = vpop.f32.mrf.mxu0
    %v356 = vpop.f32.mrf.mxu0
    %v357 = vpop.f32.mrf.mxu0
    %358 = vdwg.mxu0
    %vm359 = vcmask 31744
    %360 = vst.msk [vmem:[%s7] sm:$0xff] %vm359, %v354
    // Predicated region
    $region42: #{mean_fn.1} parent=1 // pred_check
      _
    $region43: #{mean_fn.1} parent=1 // pred_check_branch
      %362 = sbr.rel (0) target = $region45
    $region44: #{mean_fn.1} parent=1 // pred_region
      _
    $region45: #{mean_fn.1} parent=1 // pred_fallthru
      _
    // Predicated region
    $region46: #{mean_fn.1} parent=1 // pred_check
      _
    $region47: #{mean_fn.1} parent=1 // pred_check_branch
      %364 = sbr.rel (0) target = $region49
    $region48: #{mean_fn.1} parent=1 // pred_region
      _
    $region49: #{mean_fn.1} parent=1 // pred_fallthru
      _
    %365 = vsyncpa [#allocation3], 1
    %366 = vsyncpa [#allocation5], 1

</llo_original>
